<compile_context>
chip_gen: v7x
topology: tpu7x:2x2x1
jax: 0.10.0
libtpu: 0.0.40
codegen_flags: <defaults>
</compile_context>

<pallas_src>
import functools

import jax
import jax.numpy as jnp
from jax.experimental import pallas as pl
from jax.experimental.pallas import tpu as pltpu

TAU = 2.0     # tau = 2  ->  v + (h - v)/tau == 0.5*(v + h)
V_TH = 1.0


def snn_kernel(x_ref, w1_ref, b1_ref, w2t_ref, b2_ref, out_ref, *, B, T):
    x = x_ref[...]        # (T*B, D_in), row index = t*B + b (time-major)
    w1 = w1_ref[...]      # (D_in, H)
    b1 = b1_ref[...]      # (1, H)
    w2t = w2t_ref[...]    # (D_out, H)  (fc2 weight, transposed)
    b2 = b2_ref[...]      # (1, D_out)

    D_in, H = w1.shape
    D_out = w2t.shape[0]
    decision_start = T // 2

    # ---- fc1 for ALL timesteps at once, pure VPU (K = D_in = 2) ----
    h1_all = x[:, 0:1] * w1[0:1, :]                       # (T*B, H)
    for k in range(1, D_in):                              # static, tiny
        h1_all = h1_all + x[:, k:k + 1] * w1[k:k + 1, :]
    h1_all = h1_all + b1

    # ---- LIF1 scan: statically unrolled, pure VPU ----
    v1 = jnp.zeros((B, H), jnp.float32)
    s1_list = []
    for t in range(T):
        h1_t = h1_all[t * B:(t + 1) * B, :]               # static slice
        v1 = 0.5 * (v1 + h1_t)                            # charge (tau = 2)
        spike1 = v1 >= V_TH                               # fire
        s1_list.append(spike1.astype(jnp.float32))
        v1 = jnp.where(spike1, 0.0, v1)                   # hard reset to 0

    # ---- fc2 for ALL timesteps at once (N = D_out = 1): mul + lane reduce ----
    s1_all = jnp.concatenate(s1_list, axis=0)             # (T*B, H)
    cols = [jnp.sum(s1_all * w2t[j:j + 1, :], axis=-1, keepdims=True)
            for j in range(D_out)]
    h2_all = cols[0] if D_out == 1 else jnp.concatenate(cols, axis=-1)
    h2_all = h2_all + b2                                  # (T*B, D_out)

    # ---- LIF2 scan + accumulation over the decision window ----
    v2 = jnp.zeros((B, D_out), jnp.float32)
    acc = jnp.zeros((B, D_out), jnp.float32)
    for t in range(T):
        h2_t = h2_all[t * B:(t + 1) * B, :]
        v2 = 0.5 * (v2 + h2_t)
        spike2 = v2 >= V_TH
        s2 = spike2.astype(jnp.float32)
        v2 = jnp.where(spike2, 0.0, v2)
        if t >= decision_start:
            acc = acc + s2

    out_ref[...] = acc


def delayed_xor_vanilla_snn(x, w1, b1, w2, b2):
    """x: (B, T, D_in) f32 -> (B, D_out) f32."""
    B, T, D_in = x.shape
    H = w1.shape[1]
    D_out = w2.shape[1]

    # Time-major flatten so per-timestep slabs are contiguous static slices,
    # and transpose w2 so its broadcast against (T*B, H) is lane-dense (H last).
    x_tb = jnp.transpose(x, (1, 0, 2)).reshape(T * B, D_in)
    w2t = jnp.transpose(w2)                               # (D_out, H)

    vmem = pltpu.MemorySpace.VMEM
    kernel = functools.partial(snn_kernel, B=B, T=T)
    # Single grid point: total resident data is a few KiB, far under VMEM on
    # v5e/v6e/v7x, so no tiling / extra buffering is added.
    # TODO(synk): if batch grows, add a grid over B with
    #   dimension_semantics=("parallel",) to use both v7x TensorCores.
    return pl.pallas_call(
        kernel,
        out_shape=jax.ShapeDtypeStruct((B, D_out), jnp.float32),
        in_specs=[
            pl.BlockSpec((T * B, D_in), lambda: (0, 0), memory_space=vmem),
            pl.BlockSpec((D_in, H), lambda: (0, 0), memory_space=vmem),
            pl.BlockSpec((1, H), lambda: (0, 0), memory_space=vmem),
            pl.BlockSpec((D_out, H), lambda: (0, 0), memory_space=vmem),
            pl.BlockSpec((1, D_out), lambda: (0, 0), memory_space=vmem),
        ],
        out_specs=pl.BlockSpec((B, D_out), lambda: (0, 0), memory_space=vmem),
    )(x_tb, w1, b1, w2t, b2)


def init_params(key, input_size=2, hidden_size=32, output_size=1):
    """Deterministic init mimicking torch.nn.Linear (U[-1/sqrt(fan_in), 1/sqrt(fan_in)])."""
    k1, k2, k3, k4 = jax.random.split(key, 4)
    bound1 = 1.0 / jnp.sqrt(jnp.float32(input_size))
    bound2 = 1.0 / jnp.sqrt(jnp.float32(hidden_size))
    w1 = jax.random.uniform(k1, (input_size, hidden_size), jnp.float32, -bound1, bound1)
    b1 = jax.random.uniform(k2, (1, hidden_size), jnp.float32, -bound1, bound1)
    w2 = jax.random.uniform(k3, (hidden_size, output_size), jnp.float32, -bound2, bound2)
    b2 = jax.random.uniform(k4, (1, output_size), jnp.float32, -bound2, bound2)
    return w1, b1, w2, b2


def reference_forward(x, w1, b1, w2, b2):
    """Pure-JAX reference of the same SNN forward (original per-timestep form)."""
    B, T, _ = x.shape
    H = w1.shape[1]
    D_out = w2.shape[1]
    v1 = jnp.zeros((B, H), jnp.float32)
    v2 = jnp.zeros((B, D_out), jnp.float32)
    acc = jnp.zeros((B, D_out), jnp.float32)
    for t in range(T):
        h1 = x[:, t, :] @ w1 + b1
        v1 = v1 + (h1 - v1) / TAU
        s1 = (v1 >= V_TH).astype(jnp.float32)
        v1 = v1 * (1.0 - s1)
        h2 = s1 @ w2 + b2
        v2 = v2 + (h2 - v2) / TAU
        s2 = (v2 >= V_TH).astype(jnp.float32)
        v2 = v2 * (1.0 - s2)
        if t >= T // 2:
            acc = acc + s2
    return acc


if __name__ == "__main__":
    key = jax.random.PRNGKey(0)
    k_x, k_p = jax.random.split(key)

    batch, seq_len, input_size = 2, 8, 2
    hidden_size, output_size = 32, 1

    # Inputs scaled up a bit so some neurons actually cross threshold.
    x = 2.0 * jax.random.uniform(k_x, (batch, seq_len, input_size), jnp.float32)
    w1, b1, w2, b2 = init_params(k_p, input_size, hidden_size, output_size)

    out = delayed_xor_vanilla_snn(x, w1, b1, w2, b2)
    out = jax.block_until_ready(out)

    ref = reference_forward(x, w1, b1, w2, b2)
    assert out.shape == (batch, output_size)
    assert jnp.allclose(out, ref, atol=1e-5), (out, ref)

    print("KERNEL_OK")
</pallas_src>

<mosaic_0001>
module attributes {stable_mosaic.version = 11 : i64} {
  func.func @snn_kernel(%arg0: memref<16x2xf32, #tpu.memory_space<vmem>>, %arg1: memref<2x32xf32, #tpu.memory_space<vmem>>, %arg2: memref<1x32xf32, #tpu.memory_space<vmem>>, %arg3: memref<1x32xf32, #tpu.memory_space<vmem>>, %arg4: memref<1x1xf32, #tpu.memory_space<vmem>>, %arg5: memref<2x1xf32, #tpu.memory_space<vmem>>) attributes {dimension_semantics = [], scalar_prefetch = 0 : i64, scratch_operands = 0 : i64, tpu.core_type = #tpu.core_type<tc>} {
    %c0 = arith.constant 0 : index
    %c0_0 = arith.constant 0 : index
    %0 = vector.load %arg0[%c0, %c0_0] : memref<16x2xf32, #tpu.memory_space<vmem>>, vector<16x2xf32>
    %c0_1 = arith.constant 0 : index
    %c0_2 = arith.constant 0 : index
    %1 = vector.load %arg1[%c0_1, %c0_2] : memref<2x32xf32, #tpu.memory_space<vmem>>, vector<2x32xf32>
    %c0_3 = arith.constant 0 : index
    %c0_4 = arith.constant 0 : index
    %2 = vector.load %arg2[%c0_3, %c0_4] : memref<1x32xf32, #tpu.memory_space<vmem>>, vector<1x32xf32>
    %c0_5 = arith.constant 0 : index
    %c0_6 = arith.constant 0 : index
    %3 = vector.load %arg3[%c0_5, %c0_6] : memref<1x32xf32, #tpu.memory_space<vmem>>, vector<1x32xf32>
    %c0_7 = arith.constant 0 : index
    %c0_8 = arith.constant 0 : index
    %4 = vector.load %arg4[%c0_7, %c0_8] : memref<1x1xf32, #tpu.memory_space<vmem>>, vector<1x1xf32>
    %5 = vector.extract_strided_slice %0 {offsets = [0, 0], sizes = [16, 1], strides = [1, 1]} : vector<16x2xf32> to vector<16x1xf32>
    %6 = vector.extract_strided_slice %1 {offsets = [0, 0], sizes = [1, 32], strides = [1, 1]} : vector<2x32xf32> to vector<1x32xf32>
    %7 = vector.broadcast %5 : vector<16x1xf32> to vector<16x32xf32>
    %8 = vector.broadcast %6 : vector<1x32xf32> to vector<16x32xf32>
    %9 = arith.mulf %7, %8 : vector<16x32xf32>
    %10 = vector.extract_strided_slice %0 {offsets = [0, 1], sizes = [16, 1], strides = [1, 1]} : vector<16x2xf32> to vector<16x1xf32>
    %11 = vector.extract_strided_slice %1 {offsets = [1, 0], sizes = [1, 32], strides = [1, 1]} : vector<2x32xf32> to vector<1x32xf32>
    %12 = vector.broadcast %10 : vector<16x1xf32> to vector<16x32xf32>
    %13 = vector.broadcast %11 : vector<1x32xf32> to vector<16x32xf32>
    %14 = arith.mulf %12, %13 : vector<16x32xf32>
    %15 = arith.addf %9, %14 : vector<16x32xf32>
    %16 = vector.broadcast %2 : vector<1x32xf32> to vector<16x32xf32>
    %17 = arith.addf %15, %16 : vector<16x32xf32>
    %cst = arith.constant 0.000000e+00 : f32
    %18 = vector.broadcast %cst : f32 to vector<2x32xf32>
    %19 = vector.extract_strided_slice %17 {offsets = [0, 0], sizes = [2, 32], strides = [1, 1]} : vector<16x32xf32> to vector<2x32xf32>
    %20 = arith.addf %18, %19 : vector<2x32xf32>
    %cst_9 = arith.constant 5.000000e-01 : f32
    %21 = vector.broadcast %cst_9 : f32 to vector<2x32xf32>
    %22 = arith.mulf %21, %20 : vector<2x32xf32>
    %cst_10 = arith.constant 1.000000e+00 : f32
    %23 = vector.broadcast %cst_10 : f32 to vector<2x32xf32>
    %24 = arith.cmpf oge, %22, %23 : vector<2x32xf32>
    %25 = arith.extui %24 : vector<2x32xi1> to vector<2x32xi32>
    %26 = arith.sitofp %25 : vector<2x32xi32> to vector<2x32xf32>
    %cst_11 = arith.constant 0.000000e+00 : f32
    %27 = vector.broadcast %cst_11 : f32 to vector<2x32xf32>
    %28 = arith.select %24, %27, %22 : vector<2x32xi1>, vector<2x32xf32>
    %29 = vector.extract_strided_slice %17 {offsets = [2, 0], sizes = [2, 32], strides = [1, 1]} : vector<16x32xf32> to vector<2x32xf32>
    %30 = arith.addf %28, %29 : vector<2x32xf32>
    %cst_12 = arith.constant 5.000000e-01 : f32
    %31 = vector.broadcast %cst_12 : f32 to vector<2x32xf32>
    %32 = arith.mulf %31, %30 : vector<2x32xf32>
    %cst_13 = arith.constant 1.000000e+00 : f32
    %33 = vector.broadcast %cst_13 : f32 to vector<2x32xf32>
    %34 = arith.cmpf oge, %32, %33 : vector<2x32xf32>
    %35 = arith.extui %34 : vector<2x32xi1> to vector<2x32xi32>
    %36 = arith.sitofp %35 : vector<2x32xi32> to vector<2x32xf32>
    %cst_14 = arith.constant 0.000000e+00 : f32
    %37 = vector.broadcast %cst_14 : f32 to vector<2x32xf32>
    %38 = arith.select %34, %37, %32 : vector<2x32xi1>, vector<2x32xf32>
    %39 = vector.extract_strided_slice %17 {offsets = [4, 0], sizes = [2, 32], strides = [1, 1]} : vector<16x32xf32> to vector<2x32xf32>
    %40 = arith.addf %38, %39 : vector<2x32xf32>
    %cst_15 = arith.constant 5.000000e-01 : f32
    %41 = vector.broadcast %cst_15 : f32 to vector<2x32xf32>
    %42 = arith.mulf %41, %40 : vector<2x32xf32>
    %cst_16 = arith.constant 1.000000e+00 : f32
    %43 = vector.broadcast %cst_16 : f32 to vector<2x32xf32>
    %44 = arith.cmpf oge, %42, %43 : vector<2x32xf32>
    %45 = arith.extui %44 : vector<2x32xi1> to vector<2x32xi32>
    %46 = arith.sitofp %45 : vector<2x32xi32> to vector<2x32xf32>
    %cst_17 = arith.constant 0.000000e+00 : f32
    %47 = vector.broadcast %cst_17 : f32 to vector<2x32xf32>
    %48 = arith.select %44, %47, %42 : vector<2x32xi1>, vector<2x32xf32>
    %49 = vector.extract_strided_slice %17 {offsets = [6, 0], sizes = [2, 32], strides = [1, 1]} : vector<16x32xf32> to vector<2x32xf32>
    %50 = arith.addf %48, %49 : vector<2x32xf32>
    %cst_18 = arith.constant 5.000000e-01 : f32
    %51 = vector.broadcast %cst_18 : f32 to vector<2x32xf32>
    %52 = arith.mulf %51, %50 : vector<2x32xf32>
    %cst_19 = arith.constant 1.000000e+00 : f32
    %53 = vector.broadcast %cst_19 : f32 to vector<2x32xf32>
    %54 = arith.cmpf oge, %52, %53 : vector<2x32xf32>
    %55 = arith.extui %54 : vector<2x32xi1> to vector<2x32xi32>
    %56 = arith.sitofp %55 : vector<2x32xi32> to vector<2x32xf32>
    %cst_20 = arith.constant 0.000000e+00 : f32
    %57 = vector.broadcast %cst_20 : f32 to vector<2x32xf32>
    %58 = arith.select %54, %57, %52 : vector<2x32xi1>, vector<2x32xf32>
    %59 = vector.extract_strided_slice %17 {offsets = [8, 0], sizes = [2, 32], strides = [1, 1]} : vector<16x32xf32> to vector<2x32xf32>
    %60 = arith.addf %58, %59 : vector<2x32xf32>
    %cst_21 = arith.constant 5.000000e-01 : f32
    %61 = vector.broadcast %cst_21 : f32 to vector<2x32xf32>
    %62 = arith.mulf %61, %60 : vector<2x32xf32>
    %cst_22 = arith.constant 1.000000e+00 : f32
    %63 = vector.broadcast %cst_22 : f32 to vector<2x32xf32>
    %64 = arith.cmpf oge, %62, %63 : vector<2x32xf32>
    %65 = arith.extui %64 : vector<2x32xi1> to vector<2x32xi32>
    %66 = arith.sitofp %65 : vector<2x32xi32> to vector<2x32xf32>
    %cst_23 = arith.constant 0.000000e+00 : f32
    %67 = vector.broadcast %cst_23 : f32 to vector<2x32xf32>
    %68 = arith.select %64, %67, %62 : vector<2x32xi1>, vector<2x32xf32>
    %69 = vector.extract_strided_slice %17 {offsets = [10, 0], sizes = [2, 32], strides = [1, 1]} : vector<16x32xf32> to vector<2x32xf32>
    %70 = arith.addf %68, %69 : vector<2x32xf32>
    %cst_24 = arith.constant 5.000000e-01 : f32
    %71 = vector.broadcast %cst_24 : f32 to vector<2x32xf32>
    %72 = arith.mulf %71, %70 : vector<2x32xf32>
    %cst_25 = arith.constant 1.000000e+00 : f32
    %73 = vector.broadcast %cst_25 : f32 to vector<2x32xf32>
    %74 = arith.cmpf oge, %72, %73 : vector<2x32xf32>
    %75 = arith.extui %74 : vector<2x32xi1> to vector<2x32xi32>
    %76 = arith.sitofp %75 : vector<2x32xi32> to vector<2x32xf32>
    %cst_26 = arith.constant 0.000000e+00 : f32
    %77 = vector.broadcast %cst_26 : f32 to vector<2x32xf32>
    %78 = arith.select %74, %77, %72 : vector<2x32xi1>, vector<2x32xf32>
    %79 = vector.extract_strided_slice %17 {offsets = [12, 0], sizes = [2, 32], strides = [1, 1]} : vector<16x32xf32> to vector<2x32xf32>
    %80 = arith.addf %78, %79 : vector<2x32xf32>
    %cst_27 = arith.constant 5.000000e-01 : f32
    %81 = vector.broadcast %cst_27 : f32 to vector<2x32xf32>
    %82 = arith.mulf %81, %80 : vector<2x32xf32>
    %cst_28 = arith.constant 1.000000e+00 : f32
    %83 = vector.broadcast %cst_28 : f32 to vector<2x32xf32>
    %84 = arith.cmpf oge, %82, %83 : vector<2x32xf32>
    %85 = arith.extui %84 : vector<2x32xi1> to vector<2x32xi32>
    %86 = arith.sitofp %85 : vector<2x32xi32> to vector<2x32xf32>
    %cst_29 = arith.constant 0.000000e+00 : f32
    %87 = vector.broadcast %cst_29 : f32 to vector<2x32xf32>
    %88 = arith.select %84, %87, %82 : vector<2x32xi1>, vector<2x32xf32>
    %89 = vector.extract_strided_slice %17 {offsets = [14, 0], sizes = [2, 32], strides = [1, 1]} : vector<16x32xf32> to vector<2x32xf32>
    %90 = arith.addf %88, %89 : vector<2x32xf32>
    %cst_30 = arith.constant 5.000000e-01 : f32
    %91 = vector.broadcast %cst_30 : f32 to vector<2x32xf32>
    %92 = arith.mulf %91, %90 : vector<2x32xf32>
    %cst_31 = arith.constant 1.000000e+00 : f32
    %93 = vector.broadcast %cst_31 : f32 to vector<2x32xf32>
    %94 = arith.cmpf oge, %92, %93 : vector<2x32xf32>
    %95 = arith.extui %94 : vector<2x32xi1> to vector<2x32xi32>
    %96 = arith.sitofp %95 : vector<2x32xi32> to vector<2x32xf32>
    %97 = tpu.concatenate %26, %36, %46, %56, %66, %76, %86, %96 in 0 : vector<2x32xf32>, vector<2x32xf32>, vector<2x32xf32>, vector<2x32xf32>, vector<2x32xf32>, vector<2x32xf32>, vector<2x32xf32>, vector<2x32xf32> -> vector<16x32xf32>
    %98 = vector.broadcast %3 : vector<1x32xf32> to vector<16x32xf32>
    %99 = arith.mulf %97, %98 : vector<16x32xf32>
    %cst_32 = arith.constant dense<0.000000e+00> : vector<16xf32>
    %100 = vector.multi_reduction <add>, %99, %cst_32 [1] : vector<16x32xf32> to vector<16xf32>
    %101 = vector.shape_cast %100 : vector<16xf32> to vector<16x1xf32>
    %102 = vector.broadcast %4 : vector<1x1xf32> to vector<16x1xf32>
    %103 = arith.addf %101, %102 : vector<16x1xf32>
    %cst_33 = arith.constant 0.000000e+00 : f32
    %104 = vector.broadcast %cst_33 : f32 to vector<2x1xf32>
    %cst_34 = arith.constant 0.000000e+00 : f32
    %105 = vector.broadcast %cst_34 : f32 to vector<2x1xf32>
    %106 = vector.extract_strided_slice %103 {offsets = [0, 0], sizes = [2, 1], strides = [1, 1]} : vector<16x1xf32> to vector<2x1xf32>
    %107 = arith.addf %104, %106 : vector<2x1xf32>
    %cst_35 = arith.constant 5.000000e-01 : f32
    %108 = vector.broadcast %cst_35 : f32 to vector<2x1xf32>
    %109 = arith.mulf %108, %107 : vector<2x1xf32>
    %cst_36 = arith.constant 1.000000e+00 : f32
    %110 = vector.broadcast %cst_36 : f32 to vector<2x1xf32>
    %111 = arith.cmpf oge, %109, %110 : vector<2x1xf32>
    %cst_37 = arith.constant 0.000000e+00 : f32
    %112 = vector.broadcast %cst_37 : f32 to vector<2x1xf32>
    %113 = arith.select %111, %112, %109 : vector<2x1xi1>, vector<2x1xf32>
    %114 = vector.extract_strided_slice %103 {offsets = [2, 0], sizes = [2, 1], strides = [1, 1]} : vector<16x1xf32> to vector<2x1xf32>
    %115 = arith.addf %113, %114 : vector<2x1xf32>
    %cst_38 = arith.constant 5.000000e-01 : f32
    %116 = vector.broadcast %cst_38 : f32 to vector<2x1xf32>
    %117 = arith.mulf %116, %115 : vector<2x1xf32>
    %cst_39 = arith.constant 1.000000e+00 : f32
    %118 = vector.broadcast %cst_39 : f32 to vector<2x1xf32>
    %119 = arith.cmpf oge, %117, %118 : vector<2x1xf32>
    %cst_40 = arith.constant 0.000000e+00 : f32
    %120 = vector.broadcast %cst_40 : f32 to vector<2x1xf32>
    %121 = arith.select %119, %120, %117 : vector<2x1xi1>, vector<2x1xf32>
    %122 = vector.extract_strided_slice %103 {offsets = [4, 0], sizes = [2, 1], strides = [1, 1]} : vector<16x1xf32> to vector<2x1xf32>
    %123 = arith.addf %121, %122 : vector<2x1xf32>
    %cst_41 = arith.constant 5.000000e-01 : f32
    %124 = vector.broadcast %cst_41 : f32 to vector<2x1xf32>
    %125 = arith.mulf %124, %123 : vector<2x1xf32>
    %cst_42 = arith.constant 1.000000e+00 : f32
    %126 = vector.broadcast %cst_42 : f32 to vector<2x1xf32>
    %127 = arith.cmpf oge, %125, %126 : vector<2x1xf32>
    %cst_43 = arith.constant 0.000000e+00 : f32
    %128 = vector.broadcast %cst_43 : f32 to vector<2x1xf32>
    %129 = arith.select %127, %128, %125 : vector<2x1xi1>, vector<2x1xf32>
    %130 = vector.extract_strided_slice %103 {offsets = [6, 0], sizes = [2, 1], strides = [1, 1]} : vector<16x1xf32> to vector<2x1xf32>
    %131 = arith.addf %129, %130 : vector<2x1xf32>
    %cst_44 = arith.constant 5.000000e-01 : f32
    %132 = vector.broadcast %cst_44 : f32 to vector<2x1xf32>
    %133 = arith.mulf %132, %131 : vector<2x1xf32>
    %cst_45 = arith.constant 1.000000e+00 : f32
    %134 = vector.broadcast %cst_45 : f32 to vector<2x1xf32>
    %135 = arith.cmpf oge, %133, %134 : vector<2x1xf32>
    %cst_46 = arith.constant 0.000000e+00 : f32
    %136 = vector.broadcast %cst_46 : f32 to vector<2x1xf32>
    %137 = arith.select %135, %136, %133 : vector<2x1xi1>, vector<2x1xf32>
    %138 = vector.extract_strided_slice %103 {offsets = [8, 0], sizes = [2, 1], strides = [1, 1]} : vector<16x1xf32> to vector<2x1xf32>
    %139 = arith.addf %137, %138 : vector<2x1xf32>
    %cst_47 = arith.constant 5.000000e-01 : f32
    %140 = vector.broadcast %cst_47 : f32 to vector<2x1xf32>
    %141 = arith.mulf %140, %139 : vector<2x1xf32>
    %cst_48 = arith.constant 1.000000e+00 : f32
    %142 = vector.broadcast %cst_48 : f32 to vector<2x1xf32>
    %143 = arith.cmpf oge, %141, %142 : vector<2x1xf32>
    %144 = arith.extui %143 : vector<2x1xi1> to vector<2x1xi32>
    %145 = arith.sitofp %144 : vector<2x1xi32> to vector<2x1xf32>
    %cst_49 = arith.constant 0.000000e+00 : f32
    %146 = vector.broadcast %cst_49 : f32 to vector<2x1xf32>
    %147 = arith.select %143, %146, %141 : vector<2x1xi1>, vector<2x1xf32>
    %148 = arith.addf %105, %145 : vector<2x1xf32>
    %149 = vector.extract_strided_slice %103 {offsets = [10, 0], sizes = [2, 1], strides = [1, 1]} : vector<16x1xf32> to vector<2x1xf32>
    %150 = arith.addf %147, %149 : vector<2x1xf32>
    %cst_50 = arith.constant 5.000000e-01 : f32
    %151 = vector.broadcast %cst_50 : f32 to vector<2x1xf32>
    %152 = arith.mulf %151, %150 : vector<2x1xf32>
    %cst_51 = arith.constant 1.000000e+00 : f32
    %153 = vector.broadcast %cst_51 : f32 to vector<2x1xf32>
    %154 = arith.cmpf oge, %152, %153 : vector<2x1xf32>
    %155 = arith.extui %154 : vector<2x1xi1> to vector<2x1xi32>
    %156 = arith.sitofp %155 : vector<2x1xi32> to vector<2x1xf32>
    %cst_52 = arith.constant 0.000000e+00 : f32
    %157 = vector.broadcast %cst_52 : f32 to vector<2x1xf32>
    %158 = arith.select %154, %157, %152 : vector<2x1xi1>, vector<2x1xf32>
    %159 = arith.addf %148, %156 : vector<2x1xf32>
    %160 = vector.extract_strided_slice %103 {offsets = [12, 0], sizes = [2, 1], strides = [1, 1]} : vector<16x1xf32> to vector<2x1xf32>
    %161 = arith.addf %158, %160 : vector<2x1xf32>
    %cst_53 = arith.constant 5.000000e-01 : f32
    %162 = vector.broadcast %cst_53 : f32 to vector<2x1xf32>
    %163 = arith.mulf %162, %161 : vector<2x1xf32>
    %cst_54 = arith.constant 1.000000e+00 : f32
    %164 = vector.broadcast %cst_54 : f32 to vector<2x1xf32>
    %165 = arith.cmpf oge, %163, %164 : vector<2x1xf32>
    %166 = arith.extui %165 : vector<2x1xi1> to vector<2x1xi32>
    %167 = arith.sitofp %166 : vector<2x1xi32> to vector<2x1xf32>
    %cst_55 = arith.constant 0.000000e+00 : f32
    %168 = vector.broadcast %cst_55 : f32 to vector<2x1xf32>
    %169 = arith.select %165, %168, %163 : vector<2x1xi1>, vector<2x1xf32>
    %170 = arith.addf %159, %167 : vector<2x1xf32>
    %171 = vector.extract_strided_slice %103 {offsets = [14, 0], sizes = [2, 1], strides = [1, 1]} : vector<16x1xf32> to vector<2x1xf32>
    %172 = arith.addf %169, %171 : vector<2x1xf32>
    %cst_56 = arith.constant 5.000000e-01 : f32
    %173 = vector.broadcast %cst_56 : f32 to vector<2x1xf32>
    %174 = arith.mulf %173, %172 : vector<2x1xf32>
    %cst_57 = arith.constant 1.000000e+00 : f32
    %175 = vector.broadcast %cst_57 : f32 to vector<2x1xf32>
    %176 = arith.cmpf oge, %174, %175 : vector<2x1xf32>
    %177 = arith.extui %176 : vector<2x1xi1> to vector<2x1xi32>
    %178 = arith.sitofp %177 : vector<2x1xi32> to vector<2x1xf32>
    %179 = arith.addf %170, %178 : vector<2x1xf32>
    %c0_58 = arith.constant 0 : index
    %c0_59 = arith.constant 0 : index
    %180 = vector.load %arg5[%c0_58, %c0_59] : memref<2x1xf32, #tpu.memory_space<vmem>>, vector<2x1xf32>
    tpu.vector_store %arg5[%c0_58, %c0_59], %179 {strides = array<i32>} : memref<2x1xf32, #tpu.memory_space<vmem>>, vector<2x1xf32>,
    return
  }
}

</mosaic_0001>

<llo_original>
// kernel: tpu_custom_call.1
$region0: #{tpu_custom_call.1}
  #allocation0 [shape = 'u32[]', space=smem, size = 0x4, offset = 0x4, fixed_abs, tag = 'smem constant byte address 0x4 - core index']
  #allocation1 [shape = 'u32[144,128]{1,0:T(1,128)}', space=vmem, size = 0x12000, scoped, tag = 'internal scratch']
  #allocation2 [shape = 'f32[1,1]{1,0:T(1,128)S(1)}', space=vmem, size = 0x200, scoped, tag = 'scoped memory for tpu_custom_call.1']
  %s0 = inlined_call_operand.vmem [shape: f32[16,2], index: 0, kind: input, shape index: {}]
  %s1 = inlined_call_operand.vmem [shape: f32[2,32], index: 1, kind: input, shape index: {}]
  %s2 = inlined_call_operand.vmem [shape: f32[1,32], index: 2, kind: input, shape index: {}]
  %s3 = inlined_call_operand.vmem [shape: f32[1,32], index: 3, kind: input, shape index: {}]
  %s4 = inlined_call_operand.<no memory space> [shape: f32[1,1], index: 4, kind: input, shape index: {}]
  %s5 = inlined_call_operand.vmem [shape: f32[2,1], index: 5, kind: output, shape index: {}]
  %s6 = sld [smem:[#allocation0]]
  $region30: #{tpu_custom_call.1} parent=0
    _
  %s8 = ssub.s32 1, %s6
  %s9 = scalar_select 0, %s8, %s6
  %v10 = vstv %s4
  %11 = vst [vmem:[#allocation2] sm:$0x1] %v10
  // Predicated region
  $region2: #{tpu_custom_call.1} parent=0 // pred_check
    _
  $region3: #{tpu_custom_call.1} parent=0 // pred_check_branch
    %13 = sbr.rel (0) target = $region5
  $region4: #{tpu_custom_call.1} parent=0 // pred_region
    _
  $region5: #{tpu_custom_call.1} parent=0 // pred_fallthru
    _
  // Predicated region
  $region6: #{tpu_custom_call.1} parent=0 // pred_check
    _
  $region7: #{tpu_custom_call.1} parent=0 // pred_check_branch
    %15 = sbr.rel (0) target = $region9
  $region8: #{tpu_custom_call.1} parent=0 // pred_region
    _
  $region9: #{tpu_custom_call.1} parent=0 // pred_fallthru
    _
  // Predicated region
  $region10: #{tpu_custom_call.1} parent=0 // pred_check
    _
  $region11: #{tpu_custom_call.1} parent=0 // pred_check_branch
    %17 = sbr.rel (0) target = $region13
  $region12: #{tpu_custom_call.1} parent=0 // pred_region
    _
  $region13: #{tpu_custom_call.1} parent=0 // pred_fallthru
    _
  // Predicated region
  $region14: #{tpu_custom_call.1} parent=0 // pred_check
    _
  $region15: #{tpu_custom_call.1} parent=0 // pred_check_branch
    %19 = sbr.rel (0) target = $region17
  $region16: #{tpu_custom_call.1} parent=0 // pred_region
    _
  $region17: #{tpu_custom_call.1} parent=0 // pred_fallthru
    _
  // Predicated region
  $region18: #{tpu_custom_call.1} parent=0 // pred_check
    _
  $region19: #{tpu_custom_call.1} parent=0 // pred_check_branch
    %21 = sbr.rel (0) target = $region21
  $region20: #{tpu_custom_call.1} parent=0 // pred_region
    _
  $region21: #{tpu_custom_call.1} parent=0 // pred_fallthru
    _
  %v22 = vld [vmem:[%s0] sm:$0xff]
  %v23 = vld [vmem:[%s0 + $0x8] sm:$0xff]
  %v24 = vld [vmem:[%s1] sm:$0x3]
  %v25 = vld [vmem:[%s2] sm:$0x1]
  %v26 = vld [vmem:[%s3] sm:$0x1]
  %v27 = vld [vmem:[#allocation2] sm:$0x1]
  %29 = vset.pattern.permute.xlu0 0
  %30 = vperm.xlu0 %29, %v22
  %v31 = vpop.permute.xlu0 %30
  %34 = vset.pattern.permute.xlu0 0
  %35 = vperm.xlu0 %34, %v23
  %v36 = vpop.permute.xlu0 %35
  %v38 = vlaneseq
  %v39 = vshrl.u32 %v38, 7
  %v40 = vsub.s32 0, %v39
  %v41 = vrot.slane %v24, %v40
  %v42 = vmul.f32 %v31, %v41
  %v43 = vmul.f32 %v36, %v41
  %44 = vset.pattern.permute.xlu0 1
  %45 = vperm.xlu0 %44, %v22
  %v46 = vpop.permute.xlu0 %45
  %48 = vset.pattern.permute.xlu0 1
  %49 = vperm.xlu0 %48, %v23
  %v50 = vpop.permute.xlu0 %49
  %v52 = vlaneseq
  %v53 = vshrl.u32 %v52, 7
  %v54 = vsub.s32 1, %v53
  %v55 = vrot.slane %v24, %v54
  %v56 = vmul.f32 %v46, %v55
  %v57 = vmul.f32 %v50, %v55
  %v58 = vadd.f32 %v42, %v56
  %v59 = vadd.f32 %v43, %v57
  %v61 = vlaneseq
  %v62 = vshrl.u32 %v61, 7
  %v63 = vsub.s32 0, %v62
  %v64 = vrot.slane %v25, %v63
  %v66 = vadd.f32 %v58, %v64
  %v67 = vadd.f32 %v59, %v64
  %v68 = vadd.f32 %v66, 0.0
  %v69 = vmul.f32 %v68, 0.5
  %vm70 = vcmp.ge.f32.partialorder %v69, 1.0
  %v71 = vsel %vm70, 1, 0
  %v72 = vcvt.s32.f32 %v71
  %v73 = vsel %vm70, 0.0, %v69
  %v75 = vrot.slane %v66, 2
  %v77 = vadd.f32 %v73, %v75
  %v78 = vmul.f32 %v77, 0.5
  %vm79 = vcmp.ge.f32.partialorder %v78, 1.0
  %v80 = vsel %vm79, 1, 0
  %v81 = vcvt.s32.f32 %v80
  %v82 = vsel %vm79, 0.0, %v78
  %v83 = vrot.slane %v66, 4
  %v85 = vadd.f32 %v82, %v83
  %v86 = vmul.f32 %v85, 0.5
  %vm87 = vcmp.ge.f32.partialorder %v86, 1.0
  %v88 = vsel %vm87, 1, 0
  %v89 = vcvt.s32.f32 %v88
  %v90 = vsel %vm87, 0.0, %v86
  %v91 = vrot.slane %v66, 6
  %v93 = vadd.f32 %v90, %v91
  %v94 = vmul.f32 %v93, 0.5
  %vm95 = vcmp.ge.f32.partialorder %v94, 1.0
  %v96 = vsel %vm95, 1, 0
  %v97 = vcvt.s32.f32 %v96
  %v98 = vsel %vm95, 0.0, %v94
  %v99 = vadd.f32 %v98, %v67
  %v100 = vmul.f32 %v99, 0.5
  %vm101 = vcmp.ge.f32.partialorder %v100, 1.0
  %v102 = vsel %vm101, 1, 0
  %v103 = vcvt.s32.f32 %v102
  %v104 = vsel %vm101, 0.0, %v100
  %v106 = vrot.slane %v67, 2
  %v108 = vadd.f32 %v104, %v106
  %v109 = vmul.f32 %v108, 0.5
  %vm110 = vcmp.ge.f32.partialorder %v109, 1.0
  %v111 = vsel %vm110, 1, 0
  %v112 = vcvt.s32.f32 %v111
  %v113 = vsel %vm110, 0.0, %v109
  %v114 = vrot.slane %v67, 4
  %v116 = vadd.f32 %v113, %v114
  %v117 = vmul.f32 %v116, 0.5
  %vm118 = vcmp.ge.f32.partialorder %v117, 1.0
  %v119 = vsel %vm118, 1, 0
  %v120 = vcvt.s32.f32 %v119
  %v121 = vsel %vm118, 0.0, %v117
  %v122 = vrot.slane %v67, 6
  %v124 = vadd.f32 %v121, %v122
  %v125 = vmul.f32 %v124, 0.5
  %vm126 = vcmp.ge.f32.partialorder %v125, 1.0
  %v127 = vsel %vm126, 1, 0
  %v128 = vcvt.s32.f32 %v127
  %v130 = vrot.slane %v81, 6
  %v133 = vrot.slane %v89, 4
  %v136 = vrot.slane %v97, 2
  %v139 = vrot.slane %v112, 6
  %v142 = vrot.slane %v120, 4
  %v145 = vrot.slane %v128, 2
  %vm147 = vcmask 1041408
  %v148 = vsel %vm147, %v72, %v130
  %vm149 = vcmask 1043456
  %v150 = vsel %vm149, %v148, %v133
  %vm151 = vcmask 1045504
  %v152 = vsel %vm151, %v150, %v136
  %v153 = vsel %vm147, %v103, %v139
  %v154 = vsel %vm149, %v153, %v142
  %v155 = vsel %vm151, %v154, %v145
  %v157 = vlaneseq
  %v158 = vshrl.u32 %v157, 7
  %v159 = vsub.s32 0, %v158
  %v160 = vrot.slane %v26, %v159
  %v162 = vmul.f32 %v152, %v160
  %v163 = vmul.f32 %v155, %v160
  %vm164 = vcmask 261120
  %v165 = vsel %vm164, %v162, 0.0
  %166 = vadd.xlane.f32.xlu0 %v165
  %v167 = vpop.xlane.xlu0 %166
  %v168 = vsel %vm164, %v163, 0.0
  %169 = vadd.xlane.f32.xlu0 %v168
  %v170 = vpop.xlane.xlu0 %169
  %v172 = vlaneseq
  %v173 = vshrl.u32 %v172, 7
  %v174 = vsub.s32 0, %v173
  %v175 = vrot.slane %v27, %v174
  %v177 = vadd.f32 %v167, %v175
  %v178 = vadd.f32 %v170, %v175
  %v179 = vadd.f32 %v177, 0.0
  %v180 = vmul.f32 %v179, 0.5
  %vm181 = vcmp.ge.f32.partialorder %v180, 1.0
  %v182 = vsel %vm181, 0.0, %v180
  %v184 = vrot.slane %v177, 2
  %v186 = vadd.f32 %v182, %v184
  %v187 = vmul.f32 %v186, 0.5
  %vm188 = vcmp.ge.f32.partialorder %v187, 1.0
  %v189 = vsel %vm188, 0.0, %v187
  %v190 = vrot.slane %v177, 4
  %v192 = vadd.f32 %v189, %v190
  %v193 = vmul.f32 %v192, 0.5
  %vm194 = vcmp.ge.f32.partialorder %v193, 1.0
  %v195 = vsel %vm194, 0.0, %v193
  %v196 = vrot.slane %v177, 6
  %v198 = vadd.f32 %v195, %v196
  %v199 = vmul.f32 %v198, 0.5
  %vm200 = vcmp.ge.f32.partialorder %v199, 1.0
  %v201 = vsel %vm200, 0.0, %v199
  %v202 = vadd.f32 %v201, %v178
  %v203 = vmul.f32 %v202, 0.5
  %vm204 = vcmp.ge.f32.partialorder %v203, 1.0
  %v205 = vsel %vm204, 1, 0
  %v206 = vcvt.s32.f32 %v205
  %v207 = vsel %vm204, 0.0, %v203
  %v208 = vadd.f32 %v206, 0.0
  %v210 = vrot.slane %v178, 2
  %v212 = vadd.f32 %v207, %v210
  %v213 = vmul.f32 %v212, 0.5
  %vm214 = vcmp.ge.f32.partialorder %v213, 1.0
  %v215 = vsel %vm214, 1, 0
  %v216 = vcvt.s32.f32 %v215
  %v217 = vsel %vm214, 0.0, %v213
  %v218 = vadd.f32 %v208, %v216
  %v219 = vrot.slane %v178, 4
  %v221 = vadd.f32 %v217, %v219
  %v222 = vmul.f32 %v221, 0.5
  %vm223 = vcmp.ge.f32.partialorder %v222, 1.0
  %v224 = vsel %vm223, 1, 0
  %v225 = vcvt.s32.f32 %v224
  %v226 = vsel %vm223, 0.0, %v222
  %v227 = vadd.f32 %v218, %v225
  %v228 = vrot.slane %v178, 6
  %v230 = vadd.f32 %v226, %v228
  %v231 = vmul.f32 %v230, 0.5
  %vm232 = vcmp.ge.f32.partialorder %v231, 1.0
  %v233 = vsel %vm232, 1, 0
  %v234 = vcvt.s32.f32 %v233
  %v235 = vadd.f32 %v227, %v234
  %vm236 = vcmask 1024
  %237 = vst.msk [vmem:[%s5] sm:$0x3] %vm236, %v235
  // Predicated region
  $region22: #{tpu_custom_call.1} parent=0 // pred_check
    _
  $region23: #{tpu_custom_call.1} parent=0 // pred_check_branch
    %239 = sbr.rel (0) target = $region25
  $region24: #{tpu_custom_call.1} parent=0 // pred_region
    _
  $region25: #{tpu_custom_call.1} parent=0 // pred_fallthru
    _
  // Predicated region
  $region26: #{tpu_custom_call.1} parent=0 // pred_check
    _
  $region27: #{tpu_custom_call.1} parent=0 // pred_check_branch
    %241 = sbr.rel (0) target = $region29
  $region28: #{tpu_custom_call.1} parent=0 // pred_region
    _
  $region29: #{tpu_custom_call.1} parent=0 // pred_fallthru
    _

</llo_original>
